<compile_context>
chip_gen: v5e
topology: v5e:2x2
jax: 0.10.0
libtpu: 0.0.40
codegen_flags: <defaults>
</compile_context>

<pallas_src>
import functools

import jax
import jax.numpy as jnp
from jax.experimental import pallas as pl
from jax.experimental.pallas import tpu as pltpu


def _round_up(x, m):
    return (x + m - 1) // m * m


def _fitness_kernel(b_total,
                    prot_l_ref, prot_d_ref, pos_ref, env_ref,
                    w1l_ref, b1l_ref, w2l_ref, b2l_ref,
                    w1d_ref, b1d_ref, w2d_ref, b2d_ref,
                    next_pos_ref, fit_ref):
    # ---- L branch: [H,K]@[K,TB] -> [H,TB] -> [1,TB] ----
    h_l = jnp.maximum(
        jnp.dot(w1l_ref[...], prot_l_ref[...],
                preferred_element_type=jnp.float32) + b1l_ref[...], 0.0)
    phene_l = jnp.maximum(
        jnp.dot(w2l_ref[...], h_l,
                preferred_element_type=jnp.float32) + b2l_ref[...], 0.0)   # [1,TB]

    # ---- D branch: [H,K]@[K,TB] -> [H,TB] -> [2,TB] ----
    h_d = jnp.maximum(
        jnp.dot(w1d_ref[...], prot_d_ref[...],
                preferred_element_type=jnp.float32) + b1d_ref[...], 0.0)
    phene_d = jax.nn.sigmoid(
        jnp.dot(w2d_ref[...], h_d,
                preferred_element_type=jnp.float32) + b2d_ref[...])        # [2,TB]

    # ---- position update (lane-dense [2, TB] store) ----
    next_pos = pos_ref[...] + phene_l * phene_d                            # [2,TB]
    next_pos_ref[...] = next_pos.astype(next_pos_ref.dtype)

    # ---- masked per-tile partial sum of squared error ----
    tb = prot_l_ref.shape[1]
    col = (jax.lax.broadcasted_iota(jnp.int32, (1, tb), 1)
           + pl.program_id(0) * tb)                                        # [1,TB]
    diff = next_pos - env_ref[...]
    sq = jnp.where(col < b_total, diff * diff, 0.0)                        # [2,TB]
    fit_ref[...] = jnp.broadcast_to(jnp.sum(sq), fit_ref.shape)


def fitness_forward(protein_L, protein_D, position, env, params, *, tile_b=4096):
    """Fitness forward pass over a whole population in one pallas_call.

    Layout (feature-major, lane-dense):
      protein_L, protein_D : [len_support, B]
      position, env        : [2, B]
    Returns (next_position [2, B], fitness scalar).
    """
    K, B = protein_L.shape
    H = params["w1l"].shape[0]
    assert protein_D.shape == (K, B)
    assert position.shape == (2, B) and env.shape == (2, B)

    # Tile the batch axis in multiples of 128 lanes; pad ragged remainder.
    tile_b = max(128, min(_round_up(tile_b, 128), _round_up(B, 128)))
    b_pad = _round_up(B, tile_b)
    num_tiles = b_pad // tile_b
    if b_pad != B:
        pad = b_pad - B
        protein_L = jnp.pad(protein_L, ((0, 0), (0, pad)))
        protein_D = jnp.pad(protein_D, ((0, 0), (0, pad)))
        position = jnp.pad(position, ((0, 0), (0, pad)))
        env = jnp.pad(env, ((0, 0), (0, pad)))

    def batch_spec(rows):
        return pl.BlockSpec((rows, tile_b), lambda i: (0, i))

    def pinned(shape):
        return pl.BlockSpec(shape, lambda i: (0, 0))

    in_specs = [
        batch_spec(K),                      # protein_L
        batch_spec(K),                      # protein_D
        batch_spec(2),                      # position
        batch_spec(2),                      # env
        pinned((H, K)), pinned((H, 1)),     # w1l, b1l
        pinned((1, H)), pinned((1, 1)),     # w2l, b2l
        pinned((H, K)), pinned((H, 1)),     # w1d, b1d
        pinned((2, H)), pinned((2, 1)),     # w2d, b2d
    ]
    out_shapes = (
        jax.ShapeDtypeStruct((2, b_pad), jnp.float32),           # next_pos
        jax.ShapeDtypeStruct((num_tiles, 8, 128), jnp.float32),  # MSE partials
    )
    out_specs = (
        pl.BlockSpec((2, tile_b), lambda i: (0, i)),
        pl.BlockSpec((1, 8, 128), lambda i: (i, 0, 0)),
    )

    fn = pl.pallas_call(
        functools.partial(_fitness_kernel, B),
        out_shape=out_shapes,
        grid=(num_tiles,),
        in_specs=in_specs,
        out_specs=out_specs,
        compiler_params=pltpu.CompilerParams(
            dimension_semantics=("parallel",)),   # v7x: shard tiles over 2 TCs
    )
    next_pos_pad, partials = fn(
        protein_L, protein_D, position, env,
        params["w1l"], params["b1l"], params["w2l"], params["b2l"],
        params["w1d"], params["b1d"], params["w2d"], params["b2d"])

    next_pos = next_pos_pad[:, :B]
    # Final mean uses the TRUE element count (2*B), independent of padding/tiling.
    fitness = jnp.sum(partials[:, 0, 0]) / (2.0 * B)
    return next_pos, fitness


def init_params(key, len_support, num_hidden):
    """Torch-default uniform init; weights stored torch-style as [out, in]."""
    ks = jax.random.split(key, 8)
    s1 = 1.0 / (len_support ** 0.5)
    s2 = 1.0 / (num_hidden ** 0.5)
    u = jax.random.uniform
    return {
        # Gene2Phene_L
        "w1l": u(ks[0], (num_hidden, len_support), jnp.float32, -s1, s1),
        "b1l": u(ks[1], (num_hidden, 1), jnp.float32, -s1, s1),
        "w2l": u(ks[2], (1, num_hidden), jnp.float32, -s2, s2),
        "b2l": u(ks[3], (1, 1), jnp.float32, -s2, s2),
        # Gene2Phene_D
        "w1d": u(ks[4], (num_hidden, len_support), jnp.float32, -s1, s1),
        "b1d": u(ks[5], (num_hidden, 1), jnp.float32, -s1, s1),
        "w2d": u(ks[6], (2, num_hidden), jnp.float32, -s2, s2),
        "b2d": u(ks[7], (2, 1), jnp.float32, -s2, s2),
    }


class Org:
    """Minimal stand-in for the PyTorch `Org` object (feature-major layout)."""

    def __init__(self, protein_L, protein_D, position):
        self.protein_L = protein_L      # [len_support, B]
        self.protein_D = protein_D      # [len_support, B]
        self.position = position        # [2, B]
        self.fitness = None

    def forward(self):
        return self.protein_L, self.protein_D


def fitness_module(org, env, params):
    """Mirrors Fitness.forward(Org, env): mutates org, returns it."""
    protein_L, protein_D = org.forward()
    next_pos, fit = fitness_forward(protein_L, protein_D, org.position, env,
                                    params)
    org.position = next_pos
    org.fitness = fit
    return org


def _reference(protein_L, protein_D, position, env, p):
    """Pure-JAX reference in the same feature-major layout."""
    h_l = jnp.maximum(p["w1l"] @ protein_L + p["b1l"], 0.0)
    phene_l = jnp.maximum(p["w2l"] @ h_l + p["b2l"], 0.0)
    h_d = jnp.maximum(p["w1d"] @ protein_D + p["b1d"], 0.0)
    phene_d = jax.nn.sigmoid(p["w2d"] @ h_d + p["b2d"])
    nxt = position + phene_l * phene_d
    return nxt, jnp.mean((nxt - env) ** 2)


if __name__ == "__main__":
    B, LEN_SUPPORT, NUM_HIDDEN = 8, 32, 32

    key = jax.random.PRNGKey(0)
    k_par, k_pl, k_pd, k_pos, k_env = jax.random.split(key, 5)

    params = init_params(k_par, LEN_SUPPORT, NUM_HIDDEN)
    protein_L = jax.random.normal(k_pl, (LEN_SUPPORT, B), jnp.float32)
    protein_D = jax.random.normal(k_pd, (LEN_SUPPORT, B), jnp.float32)
    position = jax.random.normal(k_pos, (2, B), jnp.float32)
    env = jax.random.normal(k_env, (2, B), jnp.float32)

    org = Org(protein_L, protein_D, position)
    org = fitness_module(org, env, params)
    jax.block_until_ready((org.position, org.fitness))

    # correctness check against pure-JAX reference
    ref_pos, ref_fit = _reference(protein_L, protein_D, position, env, params)
    assert org.position.shape == (2, B)
    assert jnp.allclose(org.position, ref_pos, atol=1e-4, rtol=1e-4)
    assert jnp.allclose(org.fitness, ref_fit, atol=1e-4, rtol=1e-4)

    print("KERNEL_OK")
</pallas_src>

<mosaic_0001>
module attributes {stable_mosaic.version = 11 : i64} {
  func.func @_fitness_kernel(%arg0: i32, %arg1: memref<32x128xf32, #tpu.memory_space<vmem>>, %arg2: memref<32x128xf32, #tpu.memory_space<vmem>>, %arg3: memref<2x128xf32, #tpu.memory_space<vmem>>, %arg4: memref<2x128xf32, #tpu.memory_space<vmem>>, %arg5: memref<32x32xf32, #tpu.memory_space<vmem>>, %arg6: memref<32x1xf32, #tpu.memory_space<vmem>>, %arg7: memref<1x32xf32, #tpu.memory_space<vmem>>, %arg8: memref<1x1xf32, #tpu.memory_space<vmem>>, %arg9: memref<32x32xf32, #tpu.memory_space<vmem>>, %arg10: memref<32x1xf32, #tpu.memory_space<vmem>>, %arg11: memref<2x32xf32, #tpu.memory_space<vmem>>, %arg12: memref<2x1xf32, #tpu.memory_space<vmem>>, %arg13: memref<2x128xf32, #tpu.memory_space<vmem>>, %arg14: memref<1x8x128xf32, #tpu.memory_space<vmem>>) attributes {dimension_semantics = [#tpu.dimension_semantics<parallel>], iteration_bounds = array<i64: 1>, scalar_prefetch = 0 : i64, scratch_operands = 0 : i64, tpu.core_type = #tpu.core_type<tc>, window_params = [{transform_indices = @transform_0, window_bounds = array<i64: 32, 128>}, {transform_indices = @transform_1, window_bounds = array<i64: 32, 128>}, {transform_indices = @transform_2, window_bounds = array<i64: 2, 128>}, {transform_indices = @transform_3, window_bounds = array<i64: 2, 128>}, {pipeline_mode = #tpu.pipeline_mode<synchronous>, transform_indices = @transform_4, window_bounds = array<i64: 32, 32>}, {pipeline_mode = #tpu.pipeline_mode<synchronous>, transform_indices = @transform_5, window_bounds = array<i64: 32, 1>}, {pipeline_mode = #tpu.pipeline_mode<synchronous>, transform_indices = @transform_6, window_bounds = array<i64: 1, 32>}, {pipeline_mode = #tpu.pipeline_mode<synchronous>, transform_indices = @transform_7, window_bounds = array<i64: 1, 1>}, {pipeline_mode = #tpu.pipeline_mode<synchronous>, transform_indices = @transform_8, window_bounds = array<i64: 32, 32>}, {pipeline_mode = #tpu.pipeline_mode<synchronous>, transform_indices = @transform_9, window_bounds = array<i64: 32, 1>}, {pipeline_mode = #tpu.pipeline_mode<synchronous>, transform_indices = @transform_10, window_bounds = array<i64: 2, 32>}, {pipeline_mode = #tpu.pipeline_mode<synchronous>, transform_indices = @transform_11, window_bounds = array<i64: 2, 1>}, {transform_indices = @transform_12, window_bounds = array<i64: 2, 128>}, {transform_indices = @transform_13, window_bounds = array<i64: 1, 8, 128>}]} {
    %c0 = arith.constant 0 : index
    %c0_0 = arith.constant 0 : index
    %0 = vector.load %arg5[%c0, %c0_0] : memref<32x32xf32, #tpu.memory_space<vmem>>, vector<32x32xf32>
    %c0_1 = arith.constant 0 : index
    %c0_2 = arith.constant 0 : index
    %1 = vector.load %arg1[%c0_1, %c0_2] : memref<32x128xf32, #tpu.memory_space<vmem>>, vector<32x128xf32>
    %cst = arith.constant dense<0.000000e+00> : vector<32x128xf32>
    %2 = tpu.matmul %0, %1, %cst {dimension_numbers = #tpu.dot_dimension_numbers<[1], [0], [0], [1], [0, 0, 1, 1], [], []>} : vector<32x32xf32>, vector<32x128xf32>, vector<32x128xf32> -> vector<32x128xf32>
    %c0_3 = arith.constant 0 : index
    %c0_4 = arith.constant 0 : index
    %3 = vector.load %arg6[%c0_3, %c0_4] : memref<32x1xf32, #tpu.memory_space<vmem>>, vector<32x1xf32>
    %4 = vector.broadcast %3 : vector<32x1xf32> to vector<32x128xf32>
    %5 = arith.addf %2, %4 : vector<32x128xf32>
    %cst_5 = arith.constant 0.000000e+00 : f32
    %6 = vector.broadcast %cst_5 : f32 to vector<32x128xf32>
    %7 = arith.maximumf %5, %6 : vector<32x128xf32>
    %c0_6 = arith.constant 0 : index
    %c0_7 = arith.constant 0 : index
    %8 = vector.load %arg7[%c0_6, %c0_7] : memref<1x32xf32, #tpu.memory_space<vmem>>, vector<1x32xf32>
    %cst_8 = arith.constant dense<0.000000e+00> : vector<1x128xf32>
    %9 = tpu.matmul %8, %7, %cst_8 {dimension_numbers = #tpu.dot_dimension_numbers<[1], [0], [0], [1], [0, 0, 1, 1], [], []>} : vector<1x32xf32>, vector<32x128xf32>, vector<1x128xf32> -> vector<1x128xf32>
    %c0_9 = arith.constant 0 : index
    %c0_10 = arith.constant 0 : index
    %10 = vector.load %arg8[%c0_9, %c0_10] : memref<1x1xf32, #tpu.memory_space<vmem>>, vector<1x1xf32>
    %11 = vector.broadcast %10 : vector<1x1xf32> to vector<1x128xf32>
    %12 = arith.addf %9, %11 : vector<1x128xf32>
    %cst_11 = arith.constant 0.000000e+00 : f32
    %13 = vector.broadcast %cst_11 : f32 to vector<1x128xf32>
    %14 = arith.maximumf %12, %13 : vector<1x128xf32>
    %c0_12 = arith.constant 0 : index
    %c0_13 = arith.constant 0 : index
    %15 = vector.load %arg9[%c0_12, %c0_13] : memref<32x32xf32, #tpu.memory_space<vmem>>, vector<32x32xf32>
    %c0_14 = arith.constant 0 : index
    %c0_15 = arith.constant 0 : index
    %16 = vector.load %arg2[%c0_14, %c0_15] : memref<32x128xf32, #tpu.memory_space<vmem>>, vector<32x128xf32>
    %cst_16 = arith.constant dense<0.000000e+00> : vector<32x128xf32>
    %17 = tpu.matmul %15, %16, %cst_16 {dimension_numbers = #tpu.dot_dimension_numbers<[1], [0], [0], [1], [0, 0, 1, 1], [], []>} : vector<32x32xf32>, vector<32x128xf32>, vector<32x128xf32> -> vector<32x128xf32>
    %c0_17 = arith.constant 0 : index
    %c0_18 = arith.constant 0 : index
    %18 = vector.load %arg10[%c0_17, %c0_18] : memref<32x1xf32, #tpu.memory_space<vmem>>, vector<32x1xf32>
    %19 = vector.broadcast %18 : vector<32x1xf32> to vector<32x128xf32>
    %20 = arith.addf %17, %19 : vector<32x128xf32>
    %cst_19 = arith.constant 0.000000e+00 : f32
    %21 = vector.broadcast %cst_19 : f32 to vector<32x128xf32>
    %22 = arith.maximumf %20, %21 : vector<32x128xf32>
    %c0_20 = arith.constant 0 : index
    %c0_21 = arith.constant 0 : index
    %23 = vector.load %arg11[%c0_20, %c0_21] : memref<2x32xf32, #tpu.memory_space<vmem>>, vector<2x32xf32>
    %cst_22 = arith.constant dense<0.000000e+00> : vector<2x128xf32>
    %24 = tpu.matmul %23, %22, %cst_22 {dimension_numbers = #tpu.dot_dimension_numbers<[1], [0], [0], [1], [0, 0, 1, 1], [], []>} : vector<2x32xf32>, vector<32x128xf32>, vector<2x128xf32> -> vector<2x128xf32>
    %c0_23 = arith.constant 0 : index
    %c0_24 = arith.constant 0 : index
    %25 = vector.load %arg12[%c0_23, %c0_24] : memref<2x1xf32, #tpu.memory_space<vmem>>, vector<2x1xf32>
    %26 = vector.broadcast %25 : vector<2x1xf32> to vector<2x128xf32>
    %27 = arith.addf %24, %26 : vector<2x128xf32>
    %28 = arith.negf %27 : vector<2x128xf32>
    %29 = math.exp %28 : vector<2x128xf32>
    %cst_25 = arith.constant 1.000000e+00 : f32
    %30 = vector.broadcast %cst_25 : f32 to vector<2x128xf32>
    %31 = arith.addf %30, %29 : vector<2x128xf32>
    %32 = arith.divf %30, %31 : vector<2x128xf32>
    %c0_26 = arith.constant 0 : index
    %c0_27 = arith.constant 0 : index
    %33 = vector.load %arg3[%c0_26, %c0_27] : memref<2x128xf32, #tpu.memory_space<vmem>>, vector<2x128xf32>
    %34 = vector.broadcast %14 : vector<1x128xf32> to vector<2x128xf32>
    %35 = arith.mulf %34, %32 : vector<2x128xf32>
    %36 = arith.addf %33, %35 : vector<2x128xf32>
    %c0_28 = arith.constant 0 : index
    %c0_29 = arith.constant 0 : index
    %37 = vector.load %arg13[%c0_28, %c0_29] : memref<2x128xf32, #tpu.memory_space<vmem>>, vector<2x128xf32>
    tpu.vector_store %arg13[%c0_28, %c0_29], %36 {strides = array<i32>} : memref<2x128xf32, #tpu.memory_space<vmem>>, vector<2x128xf32>,
    %38 = tpu.iota {dimensions = array<i32: 1>} : vector<1x128xi32>
    %c128_i32 = arith.constant 128 : i32
    %39 = arith.muli %arg0, %c128_i32 : i32
    %40 = vector.broadcast %39 : i32 to vector<1x128xi32>
    %41 = arith.addi %38, %40 : vector<1x128xi32>
    %c0_30 = arith.constant 0 : index
    %c0_31 = arith.constant 0 : index
    %42 = vector.load %arg4[%c0_30, %c0_31] : memref<2x128xf32, #tpu.memory_space<vmem>>, vector<2x128xf32>
    %43 = arith.subf %36, %42 : vector<2x128xf32>
    %c8_i32 = arith.constant 8 : i32
    %44 = vector.broadcast %c8_i32 : i32 to vector<1x128xi32>
    %45 = arith.cmpi slt, %41, %44 : vector<1x128xi32>
    %46 = arith.mulf %43, %43 : vector<2x128xf32>
    %cst_32 = arith.constant 0.000000e+00 : f32
    %47 = vector.shape_cast %45 : vector<1x128xi1> to vector<1x128xi1>
    %48 = vector.broadcast %47 : vector<1x128xi1> to vector<2x128xi1>
    %49 = vector.broadcast %cst_32 : f32 to vector<2x128xf32>
    %50 = arith.select %48, %46, %49 : vector<2x128xi1>, vector<2x128xf32>
    %51 = vector.shape_cast %50 : vector<2x128xf32> to vector<1x2x128xf32>
    %cst_33 = arith.constant dense<0.000000e+00> : vector<1xf32>
    %52 = vector.multi_reduction <add>, %51, %cst_33 [1, 2] : vector<1x2x128xf32> to vector<1xf32>
    %53 = vector.shape_cast %52 : vector<1xf32> to vector<1x1x1xf32>
    %54 = vector.extract %53[0, 0, 0] : f32 from vector<1x1x1xf32>
    %55 = vector.broadcast %54 : f32 to vector<1x8x128xf32>
    %c0_34 = arith.constant 0 : index
    %c0_35 = arith.constant 0 : index
    %c0_36 = arith.constant 0 : index
    %56 = vector.load %arg14[%c0_34, %c0_35, %c0_36] : memref<1x8x128xf32, #tpu.memory_space<vmem>>, vector<1x8x128xf32>
    tpu.vector_store %arg14[%c0_34, %c0_35, %c0_36], %55 {strides = array<i32>} : memref<1x8x128xf32, #tpu.memory_space<vmem>>, vector<1x8x128xf32>,
    return
  }
  func.func @transform_0(%arg0: i32) -> (i32, i32) {
    %c0_i32 = arith.constant 0 : i32
    %c0_i32_0 = arith.constant 0 : i32
    return %c0_i32, %arg0 : i32, i32
  }
  func.func @transform_1(%arg0: i32) -> (i32, i32) {
    %c0_i32 = arith.constant 0 : i32
    %c0_i32_0 = arith.constant 0 : i32
    return %c0_i32, %arg0 : i32, i32
  }
  func.func @transform_2(%arg0: i32) -> (i32, i32) {
    %c0_i32 = arith.constant 0 : i32
    %c0_i32_0 = arith.constant 0 : i32
    return %c0_i32, %arg0 : i32, i32
  }
  func.func @transform_3(%arg0: i32) -> (i32, i32) {
    %c0_i32 = arith.constant 0 : i32
    %c0_i32_0 = arith.constant 0 : i32
    return %c0_i32, %arg0 : i32, i32
  }
  func.func @transform_4(%arg0: i32) -> (i32, i32) {
    %c0_i32 = arith.constant 0 : i32
    %c0_i32_0 = arith.constant 0 : i32
    %c0_i32_1 = arith.constant 0 : i32
    return %c0_i32, %c0_i32_0 : i32, i32
  }
  func.func @transform_5(%arg0: i32) -> (i32, i32) {
    %c0_i32 = arith.constant 0 : i32
    %c0_i32_0 = arith.constant 0 : i32
    %c0_i32_1 = arith.constant 0 : i32
    return %c0_i32, %c0_i32_0 : i32, i32
  }
  func.func @transform_6(%arg0: i32) -> (i32, i32) {
    %c0_i32 = arith.constant 0 : i32
    %c0_i32_0 = arith.constant 0 : i32
    %c0_i32_1 = arith.constant 0 : i32
    return %c0_i32, %c0_i32_0 : i32, i32
  }
  func.func @transform_7(%arg0: i32) -> (i32, i32) {
    %c0_i32 = arith.constant 0 : i32
    %c0_i32_0 = arith.constant 0 : i32
    %c0_i32_1 = arith.constant 0 : i32
    return %c0_i32, %c0_i32_0 : i32, i32
  }
  func.func @transform_8(%arg0: i32) -> (i32, i32) {
    %c0_i32 = arith.constant 0 : i32
    %c0_i32_0 = arith.constant 0 : i32
    %c0_i32_1 = arith.constant 0 : i32
    return %c0_i32, %c0_i32_0 : i32, i32
  }
  func.func @transform_9(%arg0: i32) -> (i32, i32) {
    %c0_i32 = arith.constant 0 : i32
    %c0_i32_0 = arith.constant 0 : i32
    %c0_i32_1 = arith.constant 0 : i32
    return %c0_i32, %c0_i32_0 : i32, i32
  }
  func.func @transform_10(%arg0: i32) -> (i32, i32) {
    %c0_i32 = arith.constant 0 : i32
    %c0_i32_0 = arith.constant 0 : i32
    %c0_i32_1 = arith.constant 0 : i32
    return %c0_i32, %c0_i32_0 : i32, i32
  }
  func.func @transform_11(%arg0: i32) -> (i32, i32) {
    %c0_i32 = arith.constant 0 : i32
    %c0_i32_0 = arith.constant 0 : i32
    %c0_i32_1 = arith.constant 0 : i32
    return %c0_i32, %c0_i32_0 : i32, i32
  }
  func.func @transform_12(%arg0: i32) -> (i32, i32) {
    %c0_i32 = arith.constant 0 : i32
    %c0_i32_0 = arith.constant 0 : i32
    return %c0_i32, %arg0 : i32, i32
  }
  func.func @transform_13(%arg0: i32) -> (i32, i32, i32) {
    %c0_i32 = arith.constant 0 : i32
    %c0_i32_0 = arith.constant 0 : i32
    %c0_i32_1 = arith.constant 0 : i32
    return %arg0, %c0_i32, %c0_i32_0 : i32, i32, i32
  }
}

</mosaic_0001>

<llo_original>
// kernel: tpu_custom_call.1
$region0: #{tpu_custom_call.1}
  #allocation0 [shape = 'u32[]', space=smem, size = 0x4, offset = 0x4, fixed_abs, tag = 'smem constant byte address 0x4 - core index']
  #allocation1 [shape = 'u32[72,128]{1,0:T(1,128)}', space=vmem, size = 0x9000, scoped, tag = 'internal scratch']
  #allocation2 [shape = 'f32[1,1]{1,0:T(1,128)S(1)}', space=vmem, size = 0x200, scoped, tag = 'scoped memory for tpu_custom_call.1']
  %s0 = inlined_call_operand.vmem [shape: f32[32,128], index: 0, kind: input, shape index: {}]
  %s1 = inlined_call_operand.vmem [shape: f32[32,128], index: 1, kind: input, shape index: {}]
  %s2 = inlined_call_operand.vmem [shape: f32[2,128], index: 2, kind: input, shape index: {}]
  %s3 = inlined_call_operand.vmem [shape: f32[2,128], index: 3, kind: input, shape index: {}]
  %s4 = inlined_call_operand.hbm [shape: f32[32,32], index: 4, kind: input, shape index: {}]
  %s5 = inlined_call_operand.vmem [shape: f32[32,1], index: 5, kind: input, shape index: {}]
  %s6 = inlined_call_operand.vmem [shape: f32[1,32], index: 6, kind: input, shape index: {}]
  %s7 = inlined_call_operand.<no memory space> [shape: f32[1,1], index: 7, kind: input, shape index: {}]
  %s8 = inlined_call_operand.hbm [shape: f32[32,32], index: 8, kind: input, shape index: {}]
  %s9 = inlined_call_operand.vmem [shape: f32[32,1], index: 9, kind: input, shape index: {}]
  %s10 = inlined_call_operand.vmem [shape: f32[2,32], index: 10, kind: input, shape index: {}]
  %s11 = inlined_call_operand.vmem [shape: f32[2,1], index: 11, kind: input, shape index: {}]
  %s12 = inlined_call_operand.hbm [shape: f32[2,128], index: 12, kind: output, shape index: {0}]
  %s13 = inlined_call_operand.hbm [shape: f32[1,8,128], index: 13, kind: output, shape index: {1}]
  %14 = xla_tuple %s12, %s13
  %s15 = sld [smem:[#allocation0]]
  $region74: #{tpu_custom_call.1} parent=0
    _
  %s17 = ssub.s32 1, %s15
  %s18 = scalar_select 0, %s17, %s15
  %v19 = vstv %s7
  %20 = vst [vmem:[#allocation2] sm:$0x1] %v19
  $region1: #{tpu_custom_call.1} parent=0
    #allocation3 [shape = 'u8[16384]{0}', space=vmem, size = 0x4000, scoped, tag = 'input window, operand 4, single buffered']
    #allocation4 [shape = 's32[1]{0}', space=sflag, size = 0x4, scoped, tag = 'scoped memory for tpu_custom_call.1']
    #allocation5 [shape = 's32[1]{0}', space=sflag, size = 0x4, scoped, tag = 'scoped memory for tpu_custom_call.1']
    #allocation6 [shape = 'u8[16384]{0}', space=vmem, size = 0x4000, scoped, tag = 'input window, operand 8, single buffered']
    #allocation7 [shape = 's32[1]{0}', space=sflag, size = 0x4, scoped, tag = 'scoped memory for tpu_custom_call.1']
    #allocation8 [shape = 'u8[1024]{0}', space=vmem, size = 0x400, scoped, tag = 'output window, operand 0, single buffered']
    #allocation9 [shape = 'u8[4096]{0}', space=vmem, size = 0x1000, scoped, tag = 'output window, operand 1, single buffered']
    #allocation10 [shape = 's32[1]{0}', space=sflag, size = 0x4, scoped, tag = 'scoped memory for tpu_custom_call.1']
    %21 = vsyncpa [#allocation4], 0
    %22 = vsyncpa [#allocation7], 0
    %23 = vsyncpa [#allocation5], 0
    %24 = vsyncpa [#allocation10], 0
    // Predicated region
    $region2: #{tpu_custom_call.1} parent=1 // pred_check
      _
    $region3: #{tpu_custom_call.1} parent=1 // pred_check_branch
      %26 = sbr.rel (0) target = $region5
    $region4: #{tpu_custom_call.1} parent=1 // pred_region
      _
    $region5: #{tpu_custom_call.1} parent=1 // pred_fallthru
      _
    // Predicated region
    $region6: #{tpu_custom_call.1} parent=1 // pred_check
      _
    $region7: #{tpu_custom_call.1} parent=1 // pred_check_branch
      %28 = sbr.rel (0) target = $region9
    $region8: #{tpu_custom_call.1} parent=1 // pred_region
      _
    $region9: #{tpu_custom_call.1} parent=1 // pred_fallthru
      _
    // Predicated region
    $region10: #{tpu_custom_call.1} parent=1 // pred_check
      _
    $region11: #{tpu_custom_call.1} parent=1 // pred_check_branch
      %30 = sbr.rel (0) target = $region13
    $region12: #{tpu_custom_call.1} parent=1 // pred_region
      _
    $region13: #{tpu_custom_call.1} parent=1 // pred_fallthru
      _
    // Predicated region
    $region14: #{tpu_custom_call.1} parent=1 // pred_check
      _
    $region15: #{tpu_custom_call.1} parent=1 // pred_check_branch
      %32 = sbr.rel (0) target = $region17
    $region16: #{tpu_custom_call.1} parent=1 // pred_region
      _
    $region17: #{tpu_custom_call.1} parent=1 // pred_fallthru
      _
    // Predicated region
    $region18: #{tpu_custom_call.1} parent=1 // pred_check
      _
    $region19: #{tpu_custom_call.1} parent=1 // pred_check_branch
      %34 = sbr.rel (0) target = $region21
    $region20: #{tpu_custom_call.1} parent=1 // pred_region
      %36 = vsyncadd [#allocation4], 0
      %s37 = sshll.u32 %s4, 4
      %s38 = int_to_ptr.hbm [resolvable:$true] %s37
      %s39 = sshll.u32 [#allocation3], 4
      %s40 = int_to_ptr.vmem [resolvable:$true] %s39
      %45 = dma.hbm_to_vmem [thread:$0]  %s38, 512, %s40, [#allocation4], 128, 128, 8
    $region21: #{tpu_custom_call.1} parent=1 // pred_fallthru
      _
    // Predicated region
    $region22: #{tpu_custom_call.1} parent=1 // pred_check
      _
    $region23: #{tpu_custom_call.1} parent=1 // pred_check_branch
      %47 = sbr.rel (0) target = $region25
    $region24: #{tpu_custom_call.1} parent=1 // pred_region
      _
    $region25: #{tpu_custom_call.1} parent=1 // pred_fallthru
      _
    // Predicated region
    $region26: #{tpu_custom_call.1} parent=1 // pred_check
      _
    $region27: #{tpu_custom_call.1} parent=1 // pred_check_branch
      %49 = sbr.rel (0) target = $region29
    $region28: #{tpu_custom_call.1} parent=1 // pred_region
      _
    $region29: #{tpu_custom_call.1} parent=1 // pred_fallthru
      _
    // Predicated region
    $region30: #{tpu_custom_call.1} parent=1 // pred_check
      _
    $region31: #{tpu_custom_call.1} parent=1 // pred_check_branch
      %51 = sbr.rel (0) target = $region33
    $region32: #{tpu_custom_call.1} parent=1 // pred_region
      _
    $region33: #{tpu_custom_call.1} parent=1 // pred_fallthru
      _
    // Predicated region
    $region34: #{tpu_custom_call.1} parent=1 // pred_check
      _
    $region35: #{tpu_custom_call.1} parent=1 // pred_check_branch
      %53 = sbr.rel (0) target = $region37
    $region36: #{tpu_custom_call.1} parent=1 // pred_region
      %55 = vsyncadd [#allocation7], 0
      %s56 = sshll.u32 %s8, 4
      %s57 = int_to_ptr.hbm [resolvable:$true] %s56
      %s58 = sshll.u32 [#allocation6], 4
      %s59 = int_to_ptr.vmem [resolvable:$true] %s58
      %64 = dma.hbm_to_vmem [thread:$0]  %s57, 512, %s59, [#allocation7], 128, 128, 8
    $region37: #{tpu_custom_call.1} parent=1 // pred_fallthru
      _
    // Predicated region
    $region38: #{tpu_custom_call.1} parent=1 // pred_check
      _
    $region39: #{tpu_custom_call.1} parent=1 // pred_check_branch
      %66 = sbr.rel (0) target = $region41
    $region40: #{tpu_custom_call.1} parent=1 // pred_region
      _
    $region41: #{tpu_custom_call.1} parent=1 // pred_fallthru
      _
    // Predicated region
    $region42: #{tpu_custom_call.1} parent=1 // pred_check
      _
    $region43: #{tpu_custom_call.1} parent=1 // pred_check_branch
      %68 = sbr.rel (0) target = $region45
    $region44: #{tpu_custom_call.1} parent=1 // pred_region
      _
    $region45: #{tpu_custom_call.1} parent=1 // pred_fallthru
      _
    // Predicated region
    $region46: #{tpu_custom_call.1} parent=1 // pred_check
      _
    $region47: #{tpu_custom_call.1} parent=1 // pred_check_branch
      %70 = sbr.rel (0) target = $region49
    $region48: #{tpu_custom_call.1} parent=1 // pred_region
      _
    $region49: #{tpu_custom_call.1} parent=1 // pred_fallthru
      _
    // Predicated region
    $region50: #{tpu_custom_call.1} parent=1 // pred_check
      _
    $region51: #{tpu_custom_call.1} parent=1 // pred_check_branch
      %72 = sbr.rel (0) target = $region53
    $region52: #{tpu_custom_call.1} parent=1 // pred_region
      %74 = dma.done [#allocation4], 512
    $region53: #{tpu_custom_call.1} parent=1 // pred_fallthru
      _
    // Predicated region
    $region54: #{tpu_custom_call.1} parent=1 // pred_check
      _
    $region55: #{tpu_custom_call.1} parent=1 // pred_check_branch
      %76 = sbr.rel (0) target = $region57
    $region56: #{tpu_custom_call.1} parent=1 // pred_region
      %78 = dma.done [#allocation7], 512
    $region57: #{tpu_custom_call.1} parent=1 // pred_fallthru
      _
    %v79 = vld [vmem:[#allocation3] sm:$0xff]
    %v80 = vld [vmem:[#allocation3 + $0x8] sm:$0xff]
    %v81 = vld [vmem:[#allocation3 + $0x10] sm:$0xff]
    %v82 = vld [vmem:[#allocation3 + $0x18] sm:$0xff]
    %v83 = vld [vmem:[%s0] sm:$0xff]
    %v84 = vld [vmem:[%s0 + $0x8] sm:$0xff]
    %v85 = vld [vmem:[%s0 + $0x10] sm:$0xff]
    %v86 = vld [vmem:[%s0 + $0x18] sm:$0xff]
    %v87 = vld [vmem:[%s5] sm:$0xff]
    %v88 = vld [vmem:[%s5 + $0x8] sm:$0xff]
    %v89 = vld [vmem:[%s5 + $0x10] sm:$0xff]
    %v90 = vld [vmem:[%s5 + $0x18] sm:$0xff]
    %92 = vset.pattern.permute.xlu0 0
    %93 = vperm.xlu0 %92, %v87
    %v94 = vpop.permute.xlu0 %93
    %97 = vset.pattern.permute.xlu0 0
    %98 = vperm.xlu0 %97, %v88
    %v99 = vpop.permute.xlu0 %98
    %102 = vset.pattern.permute.xlu0 0
    %103 = vperm.xlu0 %102, %v89
    %v104 = vpop.permute.xlu0 %103
    %107 = vset.pattern.permute.xlu0 0
    %108 = vperm.xlu0 %107, %v90
    %v109 = vpop.permute.xlu0 %108
    %vm111 = vcmask 261120
    %v113 = vsel %vm111, %v79, 0
    %v116 = vsel %vm111, %v80, 0
    %v119 = vsel %vm111, %v81, 0
    %v122 = vsel %vm111, %v82, 0
    %124 = vmatpush.msra.mxu0 0.0
    %125 = vmatpush.msra.mxu0 0.0
    %126 = vmatpush.msra.mxu0 0.0
    %127 = vmatpush.msra.mxu0 0.0
    %128 = vmatpush.msra.mxu0 0.0
    %129 = vmatpush.msra.mxu0 0.0
    %130 = vmatpush.msra.mxu0 0.0
    %131 = vmatpush.msra.mxu0 0.0
    %132 = vmatpush.msra.mxu0 0.0
    %133 = vmatpush.msra.mxu0 0.0
    %134 = vmatpush.msra.mxu0 0.0
    %135 = vmatpush.msra.mxu0 0.0
    %136 = vmatpush.msra.mxu0 %v86
    %137 = vmatpush.msra.mxu0 %v85
    %138 = vmatpush.msra.mxu0 %v84
    %139 = vmatpush.msra.mxu0 %v83
    %140 = vmatmul.f32.gmra.mxu0 %v113
    %v141 = vpop.f32.mrf.mxu0
    %v142 = vadd.f32 %v94, %v141
    %143 = vmatmul.f32.gmra.mxu0 %v116
    %v144 = vpop.f32.mrf.mxu0
    %v145 = vadd.f32 %v99, %v144
    %146 = vmatmul.f32.gmra.mxu0 %v119
    %v147 = vpop.f32.mrf.mxu0
    %v148 = vadd.f32 %v104, %v147
    %149 = vmatmul.f32.gmra.mxu0 %v122
    %v150 = vpop.f32.mrf.mxu0
    %v151 = vadd.f32 %v109, %v150
    %152 = vdwg.mxu0
    %v153 = vmax.f32 %v142, 0.0
    %v154 = vmax.f32 %v145, 0.0
    %v155 = vmax.f32 %v148, 0.0
    %v156 = vmax.f32 %v151, 0.0
    %v157 = vld [vmem:[%s6] sm:$0x1]
    %v158 = vld [vmem:[#allocation2] sm:$0x1]
    %160 = vset.pattern.permute.xlu0 0
    %161 = vperm.xlu0 %160, %v158
    %v162 = vpop.permute.xlu0 %161
    %v164 = vperm.slane %v162, 0
    %v166 = vsel %vm111, %v157, 0
    %168 = vmatpush.msra.mxu0 0.0
    %169 = vmatpush.msra.mxu0 0.0
    %170 = vmatpush.msra.mxu0 0.0
    %171 = vmatpush.msra.mxu0 0.0
    %172 = vmatpush.msra.mxu0 0.0
    %173 = vmatpush.msra.mxu0 0.0
    %174 = vmatpush.msra.mxu0 0.0
    %175 = vmatpush.msra.mxu0 0.0
    %176 = vmatpush.msra.mxu0 0.0
    %177 = vmatpush.msra.mxu0 0.0
    %178 = vmatpush.msra.mxu0 0.0
    %179 = vmatpush.msra.mxu0 0.0
    %180 = vmatpush.msra.mxu0 %v156
    %181 = vmatpush.msra.mxu0 %v155
    %182 = vmatpush.msra.mxu0 %v154
    %183 = vmatpush.msra.mxu0 %v153
    %184 = vmatmul.f32.gmra.mxu0 %v166
    %v185 = vpop.f32.mrf.mxu0
    %v186 = vadd.f32 %v164, %v185
    %187 = vdwg.mxu0
    %v188 = vmax.f32 %v186, 0.0
    %v189 = vld [vmem:[#allocation6] sm:$0xff]
    %v190 = vld [vmem:[#allocation6 + $0x8] sm:$0xff]
    %v191 = vld [vmem:[#allocation6 + $0x10] sm:$0xff]
    %v192 = vld [vmem:[#allocation6 + $0x18] sm:$0xff]
    %v193 = vld [vmem:[%s1] sm:$0xff]
    %v194 = vld [vmem:[%s1 + $0x8] sm:$0xff]
    %v195 = vld [vmem:[%s1 + $0x10] sm:$0xff]
    %v196 = vld [vmem:[%s1 + $0x18] sm:$0xff]
    %v197 = vld [vmem:[%s9] sm:$0xff]
    %v198 = vld [vmem:[%s9 + $0x8] sm:$0xff]
    %v199 = vld [vmem:[%s9 + $0x10] sm:$0xff]
    %v200 = vld [vmem:[%s9 + $0x18] sm:$0xff]
    %202 = vset.pattern.permute.xlu0 0
    %203 = vperm.xlu0 %202, %v197
    %v204 = vpop.permute.xlu0 %203
    %207 = vset.pattern.permute.xlu0 0
    %208 = vperm.xlu0 %207, %v198
    %v209 = vpop.permute.xlu0 %208
    %212 = vset.pattern.permute.xlu0 0
    %213 = vperm.xlu0 %212, %v199
    %v214 = vpop.permute.xlu0 %213
    %217 = vset.pattern.permute.xlu0 0
    %218 = vperm.xlu0 %217, %v200
    %v219 = vpop.permute.xlu0 %218
    %v222 = vsel %vm111, %v189, 0
    %v225 = vsel %vm111, %v190, 0
    %v228 = vsel %vm111, %v191, 0
    %v231 = vsel %vm111, %v192, 0
    %233 = vmatpush.msra.mxu0 0.0
    %234 = vmatpush.msra.mxu0 0.0
    %235 = vmatpush.msra.mxu0 0.0
    %236 = vmatpush.msra.mxu0 0.0
    %237 = vmatpush.msra.mxu0 0.0
    %238 = vmatpush.msra.mxu0 0.0
    %239 = vmatpush.msra.mxu0 0.0
    %240 = vmatpush.msra.mxu0 0.0
    %241 = vmatpush.msra.mxu0 0.0
    %242 = vmatpush.msra.mxu0 0.0
    %243 = vmatpush.msra.mxu0 0.0
    %244 = vmatpush.msra.mxu0 0.0
    %245 = vmatpush.msra.mxu0 %v196
    %246 = vmatpush.msra.mxu0 %v195
    %247 = vmatpush.msra.mxu0 %v194
    %248 = vmatpush.msra.mxu0 %v193
    %249 = vmatmul.f32.gmra.mxu0 %v222
    %v250 = vpop.f32.mrf.mxu0
    %v251 = vadd.f32 %v204, %v250
    %252 = vmatmul.f32.gmra.mxu0 %v225
    %v253 = vpop.f32.mrf.mxu0
    %v254 = vadd.f32 %v209, %v253
    %255 = vmatmul.f32.gmra.mxu0 %v228
    %v256 = vpop.f32.mrf.mxu0
    %v257 = vadd.f32 %v214, %v256
    %258 = vmatmul.f32.gmra.mxu0 %v231
    %v259 = vpop.f32.mrf.mxu0
    %v260 = vadd.f32 %v219, %v259
    %261 = vdwg.mxu0
    %v262 = vmax.f32 %v251, 0.0
    %v263 = vmax.f32 %v254, 0.0
    %v264 = vmax.f32 %v257, 0.0
    %v265 = vmax.f32 %v260, 0.0
    %v266 = vld [vmem:[%s10] sm:$0x3]
    %v267 = vld [vmem:[%s11] sm:$0x3]
    %269 = vset.pattern.permute.xlu0 0
    %270 = vperm.xlu0 %269, %v267
    %v271 = vpop.permute.xlu0 %270
    %v274 = vsel %vm111, %v266, 0
    %276 = vmatpush.msra.mxu0 0.0
    %277 = vmatpush.msra.mxu0 0.0
    %278 = vmatpush.msra.mxu0 0.0
    %279 = vmatpush.msra.mxu0 0.0
    %280 = vmatpush.msra.mxu0 0.0
    %281 = vmatpush.msra.mxu0 0.0
    %282 = vmatpush.msra.mxu0 0.0
    %283 = vmatpush.msra.mxu0 0.0
    %284 = vmatpush.msra.mxu0 0.0
    %285 = vmatpush.msra.mxu0 0.0
    %286 = vmatpush.msra.mxu0 0.0
    %287 = vmatpush.msra.mxu0 0.0
    %288 = vmatpush.msra.mxu0 %v265
    %289 = vmatpush.msra.mxu0 %v264
    %290 = vmatpush.msra.mxu0 %v263
    %291 = vmatpush.msra.mxu0 %v262
    %292 = vmatmul.f32.gmra.mxu0 %v274
    %v293 = vpop.f32.mrf.mxu0
    %v294 = vadd.f32 %v271, %v293
    %295 = vdwg.mxu0
    %v296 = vxor.u32 %v294, 2147483648
    %v297 = vmul.f32 %v296, 1.442695
    %v298 = vpow.pop %v297
    %v299 = vadd.f32 %v298, 1.0
    %v300 = vrcp.pop %v299
    %v301 = vmul.f32 %v299, %v300
    %v302 = vsub.f32 1.0, %v301
    %v303 = vmul.f32 %v300, %v302
    %v304 = vadd.f32 %v300, %v303
    %vm305 = vweird.f32 %v299
    %vm306 = vweird.f32 %v300
    %vm307 = vmor %vm305, %vm306
    %v308 = vsel %vm307, %v300, %v304
    %v309 = vand.u32 2147483647, %v299
    %vm310 = vcmp.eq.f32.partialorder %v309, 8.507059e+37
    %v311 = vand.u32 %v299, 2147483648
    %v312 = vor.u32 1.1754944e-38, %v311
    %v313 = vsel %vm310, %v312, %v308
    %v314 = vmul.f32 1.0, %v313
    %v315 = vld [vmem:[%s2] sm:$0x3]
    %v316 = vperm.slane %v188, 0
    %v317 = vmul.f32 %v316, %v314
    %v318 = vadd.f32 %v315, %v317
    %319 = vst [vmem:[#allocation8] sm:$0x3] %v318
    %v320 = vlaneseq
    %v321 = vand.u32 %v320, 127
    %s322 = smul.u32 0, 128
    %v323 = vstv %s322
    %v324 = vadd.s32 %v321, %v323
    %v325 = vld [vmem:[%s3] sm:$0x3]
    %v326 = vsub.f32 %v318, %v325
    %vm327 = vcmp.lt.s32.totalorder %v324, 8
    %v328 = vmul.f32 %v326, %v326
    %v329 = vsel %vm327, 1, 0
    %vm330 = vcmp.eq.s32.totalorder %v329, 1
    %v331 = vsel %vm330, %v328, 0.0
    %vm332 = vcmask 1041408
    %v333 = vsel %vm332, %v331, 0.0
    %334 = vadd.xlane.f32.xlu0 %v333
    %v335 = vpop.xlane.xlu0 %334
    %v336 = vrot.slane %v335, 4
    %v337 = vadd.f32 %v335, %v336
    %v338 = vrot.slane %v337, 2
    %v339 = vadd.f32 %v337, %v338
    %v340 = vrot.slane %v339, 1
    %v341 = vadd.f32 %v339, %v340
    %s342 = vtos %v341
    %v343 = vstv %s342
    %344 = vst [vmem:[#allocation9] sm:$0xff] %v343
    // Predicated region
    $region58: #{tpu_custom_call.1} parent=1 // pred_check
      _
    $region59: #{tpu_custom_call.1} parent=1 // pred_check_branch
      %346 = sbr.rel (0) target = $region61
    $region60: #{tpu_custom_call.1} parent=1 // pred_region
      %348 = vsyncadd [#allocation5], 0
      %s350 = sshll.u32 [#allocation8], 4
      %s351 = int_to_ptr.vmem [resolvable:$true] %s350
      %s352 = sshll.u32 %s12, 4
      %s353 = int_to_ptr.hbm [resolvable:$true] %s352
      %355 = dma.vmem_to_hbm [thread:$0]  %s351, 32, %s353, [#allocation5]
    $region61: #{tpu_custom_call.1} parent=1 // pred_fallthru
      _
    // Predicated region
    $region62: #{tpu_custom_call.1} parent=1 // pred_check
      _
    $region63: #{tpu_custom_call.1} parent=1 // pred_check_branch
      %357 = sbr.rel (0) target = $region65
    $region64: #{tpu_custom_call.1} parent=1 // pred_region
      %359 = vsyncadd [#allocation10], 0
      %s361 = sshll.u32 [#allocation9], 4
      %s362 = int_to_ptr.vmem [resolvable:$true] %s361
      %s363 = sshll.u32 %s13, 4
      %s364 = int_to_ptr.hbm [resolvable:$true] %s363
      %366 = dma.vmem_to_hbm [thread:$0]  %s362, 128, %s364, [#allocation10]
    $region65: #{tpu_custom_call.1} parent=1 // pred_fallthru
      _
    // Predicated region
    $region66: #{tpu_custom_call.1} parent=1 // pred_check
      _
    $region67: #{tpu_custom_call.1} parent=1 // pred_check_branch
      %368 = sbr.rel (0) target = $region69
    $region68: #{tpu_custom_call.1} parent=1 // pred_region
      %370 = dma.done [#allocation5], 32
    $region69: #{tpu_custom_call.1} parent=1 // pred_fallthru
      _
    // Predicated region
    $region70: #{tpu_custom_call.1} parent=1 // pred_check
      _
    $region71: #{tpu_custom_call.1} parent=1 // pred_check_branch
      %372 = sbr.rel (0) target = $region73
    $region72: #{tpu_custom_call.1} parent=1 // pred_region
      %374 = dma.done [#allocation10], 128
    $region73: #{tpu_custom_call.1} parent=1 // pred_fallthru
      _
    %375 = vsyncpa [#allocation4], 1
    %376 = vsyncpa [#allocation7], 1
    %377 = vsyncpa [#allocation5], 1
    %378 = vsyncpa [#allocation10], 1

</llo_original>
